<compile_context>
chip_gen: v7x
topology: tpu7x:2x2x1
jax: 0.10.0
libtpu: 0.0.40
codegen_flags: <defaults>
</compile_context>

<pallas_src>
import math

import jax
import jax.numpy as jnp
from jax import lax
from jax.experimental import pallas as pl
from jax.experimental.pallas import tpu as pltpu

H_NEURONS = 64
H_NEURONS2 = 16


def actor_kernel(x_ref, g_ref, w1_ref, b1_ref, w2_ref, b2_ref, w3_ref, b3_ref,
                 probs_ref, action_ref):
    x = x_ref[...]                                           # (tb, S)

    # fc1 -> ReLU -> fc2 -> ReLU (row-major, MXU, f32 accumulate).
    h1 = jnp.dot(x, w1_ref[...], preferred_element_type=jnp.float32) + b1_ref[...]
    h1 = jnp.maximum(h1, 0.0)
    h2 = jnp.dot(h1.astype(w2_ref.dtype), w2_ref[...],
                 preferred_element_type=jnp.float32) + b2_ref[...]
    h2 = jnp.maximum(h2, 0.0)                                # (tb, H2)

    # action_head computed directly in transposed (out, tb) layout via a
    # trans_b contraction (same MXU pattern as q @ k.T): batch on lanes,
    # the few actions on sublanes.
    logits_t = lax.dot_general(
        w3_ref[...], h2.astype(w3_ref.dtype),
        dimension_numbers=(((1,), (1,)), ((), ())),
        preferred_element_type=jnp.float32) + b3_ref[...]    # (out, tb)

    # sigmoid (tanh form -> single EUP transcendental), then softmax over the
    # action axis (sublanes).  s is in (0, 1) so exp(s) is safe without the
    # max-subtraction.
    s = 0.5 * (jnp.tanh(0.5 * logits_t) + 1.0)
    e = jnp.exp(s)
    denom = jnp.sum(e, axis=0, keepdims=True)                # (1, tb)
    probs_ref[...] = e / denom

    # Fused categorical sample via Gumbel-max:
    #   argmax_a(log p_a + g_a) == argmax_a(s_a + g_a)   (log denom is a
    # per-column constant).  Smallest-index tie-break via masked min.
    z = s + g_ref[...]
    na = z.shape[0]
    idx = lax.broadcasted_iota(jnp.int32, z.shape, 0).astype(jnp.float32)
    zmax = jnp.max(z, axis=0, keepdims=True)
    masked_idx = jnp.where(z >= zmax, idx, jnp.float32(na))
    action_ref[...] = jnp.min(masked_idx, axis=0, keepdims=True).astype(jnp.int32)


def _round_up(n, m):
    return ((n + m - 1) // m) * m


def actor_forward_pallas(x, params, key, *, tile_b=4096, use_bf16=False):
    """Actor forward + fused categorical (Gumbel-max) sample.

    Returns (action_probs [B, out] f32, sampled_action [B] int32).
    """
    w1, b1, w2, b2, w3, b3 = params
    B, state_size = x.shape
    h1 = w1.shape[1]
    h2 = w2.shape[1]
    out_size = w3.shape[1]

    # Head weights in PyTorch-native (out, in) / (out, 1) layout for the
    # transposed head computation.
    w3_oi = w3.T
    b3_col = b3.T

    if use_bf16:  # halves the dominant HBM input stream; accumulate stays f32
        x = x.astype(jnp.bfloat16)
        w1 = w1.astype(jnp.bfloat16)
        w2 = w2.astype(jnp.bfloat16)
        w3_oi = w3_oi.astype(jnp.bfloat16)

    # TODO(synk): torch.distributions.Categorical has no Pallas equivalent and
    # the on-chip PRNG (pltpu.prng_*) has no interpret-mode lowering, so the
    # Gumbel noise is drawn with jax.random here (lane-dense (out, B)) and only
    # the argmax sampling is fused in-kernel.
    gumbel = jax.random.gumbel(key, (out_size, B), jnp.float32)

    # Batch tiling: a single tile for small B; otherwise lane-aligned tiles
    # (multiple of 128, so all batch-axis stores stay unmasked) with >= 2 grid
    # steps so both v7x TensorCores get work.  No host-side padding: Pallas
    # masks the boundary block when B % tb != 0.
    if B <= 256:
        tb = B
    else:
        tb = min(_round_up(tile_b, 128), _round_up(pl.cdiv(B, 2), 128))
    grid = (pl.cdiv(B, tb),)

    grid_spec = pltpu.PrefetchScalarGridSpec(
        num_scalar_prefetch=0,
        grid=grid,
        in_specs=[
            pl.BlockSpec((tb, state_size), lambda i: (i, 0)),      # x
            pl.BlockSpec((out_size, tb), lambda i: (0, i)),        # gumbel
            # Weights / biases: constant index_maps -> resident across tiles.
            pl.BlockSpec((state_size, h1), lambda i: (0, 0)),      # w1 [in,out]
            pl.BlockSpec((1, h1), lambda i: (0, 0)),               # b1
            pl.BlockSpec((h1, h2), lambda i: (0, 0)),              # w2 [in,out]
            pl.BlockSpec((1, h2), lambda i: (0, 0)),               # b2
            pl.BlockSpec((out_size, h2), lambda i: (0, 0)),        # w3 [out,in]
            pl.BlockSpec((out_size, 1), lambda i: (0, 0)),         # b3 [out,1]
        ],
        out_specs=(
            pl.BlockSpec((out_size, tb), lambda i: (0, i)),        # probs^T
            pl.BlockSpec((1, tb), lambda i: (0, i)),               # action row
        ),
    )

    probs_t, action_row = pl.pallas_call(
        actor_kernel,
        out_shape=(
            jax.ShapeDtypeStruct((out_size, B), jnp.float32),
            jax.ShapeDtypeStruct((1, B), jnp.int32),
        ),
        grid_spec=grid_spec,
        compiler_params=pltpu.CompilerParams(
            dimension_semantics=("parallel",)),
    )(x, gumbel, w1, b1, w2, b2, w3_oi, b3_col)

    # Layout plumbing back to the module's convention.
    return probs_t.T, action_row[0]


def init_linear_params(key, in_features, out_features):
    """Deterministic PyTorch-style nn.Linear init: U(-1/sqrt(in), 1/sqrt(in))."""
    kw, kb = jax.random.split(key)
    bound = 1.0 / math.sqrt(in_features)
    # Stored as [in, out] (transposed vs. PyTorch) plus bias [1, out].
    w = jax.random.uniform(kw, (in_features, out_features), jnp.float32,
                           minval=-bound, maxval=bound)
    b = jax.random.uniform(kb, (1, out_features), jnp.float32,
                           minval=-bound, maxval=bound)
    return w, b


def actor(x, params, seed):
    """Actor.forward equivalent: returns (sampled action, action_probs)."""
    key = jax.random.PRNGKey(seed)
    probs, action = actor_forward_pallas(x, params, key)
    return jnp.squeeze(action), probs


if __name__ == "__main__":
    # Small shapes consistent with the module:
    #   state_size=32, action_len=2, action_size=4 -> out_size=8.
    STATE_SIZE = 32
    ACTION_LEN = 2
    ACTION_SIZE = 4
    OUT_SIZE = ACTION_LEN * ACTION_SIZE

    root = jax.random.PRNGKey(0)
    k1, k2, k3, kx1, kx2 = jax.random.split(root, 5)

    w1, b1 = init_linear_params(k1, STATE_SIZE, H_NEURONS)
    w2, b2 = init_linear_params(k2, H_NEURONS, H_NEURONS2)
    w3, b3 = init_linear_params(k3, H_NEURONS2, OUT_SIZE)
    params = (w1, b1, w2, b2, w3, b3)

    def ref_forward(x, params):
        w1, b1, w2, b2, w3, b3 = params
        h1 = jnp.maximum(x @ w1 + b1, 0.0)
        h2 = jnp.maximum(h1 @ w2 + b2, 0.0)
        logits = h2 @ w3 + b3
        return jax.nn.softmax(jax.nn.sigmoid(logits), axis=-1)

    def check(x_key, batch, seed):
        x = jax.random.normal(x_key, (batch, STATE_SIZE), jnp.float32)
        action, probs = actor(x, params, seed=seed)
        action = jax.block_until_ready(action)
        probs = jax.block_until_ready(probs)

        # Forward pass matches the pure-JAX reference.
        ref_probs = ref_forward(x, params)
        assert probs.shape == (batch, OUT_SIZE)
        assert jnp.allclose(jnp.sum(probs, axis=-1), 1.0, atol=1e-4)
        assert jnp.allclose(probs, ref_probs, atol=1e-3, rtol=1e-3)

        # Sampled action sanity.
        assert action.shape == (batch,)
        assert action.dtype == jnp.int32
        assert bool(jnp.all((action >= 0) & (action < OUT_SIZE)))

        # The fused sample must be the Gumbel-max argmax of the kernel's own
        # distribution under the same (reproducible) noise.
        g = jax.random.gumbel(jax.random.PRNGKey(seed), (OUT_SIZE, batch),
                              jnp.float32)
        ref_action = jnp.argmax(jnp.log(probs).T + g, axis=0).astype(jnp.int32)
        assert bool(jnp.all(action == ref_action))

    check(kx1, batch=8, seed=1234)     # single-tile path
    check(kx2, batch=512, seed=97)     # multi-tile (grid=2), lane-aligned path
    print("KERNEL_OK")
</pallas_src>

<mosaic_0001>
module attributes {stable_mosaic.version = 11 : i64} {
  func.func @actor_kernel(%arg0: i32, %arg1: memref<8x32xf32, #tpu.memory_space<vmem>>, %arg2: memref<8x8xf32, #tpu.memory_space<vmem>>, %arg3: memref<32x64xf32, #tpu.memory_space<vmem>>, %arg4: memref<1x64xf32, #tpu.memory_space<vmem>>, %arg5: memref<64x16xf32, #tpu.memory_space<vmem>>, %arg6: memref<1x16xf32, #tpu.memory_space<vmem>>, %arg7: memref<8x16xf32, #tpu.memory_space<vmem>>, %arg8: memref<8x1xf32, #tpu.memory_space<vmem>>, %arg9: memref<8x8xf32, #tpu.memory_space<vmem>>, %arg10: memref<1x8xi32, #tpu.memory_space<vmem>>) attributes {dimension_semantics = [#tpu.dimension_semantics<parallel>], iteration_bounds = array<i64: 1>, scalar_prefetch = 0 : i64, scratch_operands = 0 : i64, tpu.core_type = #tpu.core_type<tc>, window_params = [{transform_indices = @transform_0, window_bounds = array<i64: 8, 32>}, {transform_indices = @transform_1, window_bounds = array<i64: 8, 8>}, {pipeline_mode = #tpu.pipeline_mode<synchronous>, transform_indices = @transform_2, window_bounds = array<i64: 32, 64>}, {pipeline_mode = #tpu.pipeline_mode<synchronous>, transform_indices = @transform_3, window_bounds = array<i64: 1, 64>}, {pipeline_mode = #tpu.pipeline_mode<synchronous>, transform_indices = @transform_4, window_bounds = array<i64: 64, 16>}, {pipeline_mode = #tpu.pipeline_mode<synchronous>, transform_indices = @transform_5, window_bounds = array<i64: 1, 16>}, {pipeline_mode = #tpu.pipeline_mode<synchronous>, transform_indices = @transform_6, window_bounds = array<i64: 8, 16>}, {pipeline_mode = #tpu.pipeline_mode<synchronous>, transform_indices = @transform_7, window_bounds = array<i64: 8, 1>}, {transform_indices = @transform_8, window_bounds = array<i64: 8, 8>}, {transform_indices = @transform_9, window_bounds = array<i64: 1, 8>}]} {
    %c0 = arith.constant 0 : index
    %c0_0 = arith.constant 0 : index
    %0 = vector.load %arg1[%c0, %c0_0] : memref<8x32xf32, #tpu.memory_space<vmem>>, vector<8x32xf32>
    %c0_1 = arith.constant 0 : index
    %c0_2 = arith.constant 0 : index
    %1 = vector.load %arg3[%c0_1, %c0_2] : memref<32x64xf32, #tpu.memory_space<vmem>>, vector<32x64xf32>
    %cst = arith.constant dense<0.000000e+00> : vector<8x64xf32>
    %2 = tpu.matmul %0, %1, %cst {dimension_numbers = #tpu.dot_dimension_numbers<[1], [0], [0], [1], [0, 0, 1, 1], [], []>} : vector<8x32xf32>, vector<32x64xf32>, vector<8x64xf32> -> vector<8x64xf32>
    %c0_3 = arith.constant 0 : index
    %c0_4 = arith.constant 0 : index
    %3 = vector.load %arg4[%c0_3, %c0_4] : memref<1x64xf32, #tpu.memory_space<vmem>>, vector<1x64xf32>
    %4 = vector.broadcast %3 : vector<1x64xf32> to vector<8x64xf32>
    %5 = arith.addf %2, %4 : vector<8x64xf32>
    %cst_5 = arith.constant 0.000000e+00 : f32
    %6 = vector.broadcast %cst_5 : f32 to vector<8x64xf32>
    %7 = arith.maximumf %5, %6 : vector<8x64xf32>
    %c0_6 = arith.constant 0 : index
    %c0_7 = arith.constant 0 : index
    %8 = vector.load %arg5[%c0_6, %c0_7] : memref<64x16xf32, #tpu.memory_space<vmem>>, vector<64x16xf32>
    %cst_8 = arith.constant dense<0.000000e+00> : vector<8x16xf32>
    %9 = tpu.matmul %7, %8, %cst_8 {dimension_numbers = #tpu.dot_dimension_numbers<[1], [0], [0], [1], [0, 0, 1, 1], [], []>} : vector<8x64xf32>, vector<64x16xf32>, vector<8x16xf32> -> vector<8x16xf32>
    %c0_9 = arith.constant 0 : index
    %c0_10 = arith.constant 0 : index
    %10 = vector.load %arg6[%c0_9, %c0_10] : memref<1x16xf32, #tpu.memory_space<vmem>>, vector<1x16xf32>
    %11 = vector.broadcast %10 : vector<1x16xf32> to vector<8x16xf32>
    %12 = arith.addf %9, %11 : vector<8x16xf32>
    %cst_11 = arith.constant 0.000000e+00 : f32
    %13 = vector.broadcast %cst_11 : f32 to vector<8x16xf32>
    %14 = arith.maximumf %12, %13 : vector<8x16xf32>
    %c0_12 = arith.constant 0 : index
    %c0_13 = arith.constant 0 : index
    %15 = vector.load %arg7[%c0_12, %c0_13] : memref<8x16xf32, #tpu.memory_space<vmem>>, vector<8x16xf32>
    %cst_14 = arith.constant dense<0.000000e+00> : vector<8x8xf32>
    %16 = tpu.matmul %15, %14, %cst_14 {dimension_numbers = #tpu.dot_dimension_numbers<[1], [1], [0], [0], [0, 0, 1, 0], [], []>} : vector<8x16xf32>, vector<8x16xf32>, vector<8x8xf32> -> vector<8x8xf32>
    %c0_15 = arith.constant 0 : index
    %c0_16 = arith.constant 0 : index
    %17 = vector.load %arg8[%c0_15, %c0_16] : memref<8x1xf32, #tpu.memory_space<vmem>>, vector<8x1xf32>
    %18 = vector.broadcast %17 : vector<8x1xf32> to vector<8x8xf32>
    %19 = arith.addf %16, %18 : vector<8x8xf32>
    %cst_17 = arith.constant 5.000000e-01 : f32
    %20 = vector.broadcast %cst_17 : f32 to vector<8x8xf32>
    %21 = arith.mulf %20, %19 : vector<8x8xf32>
    %22 = math.tanh %21 : vector<8x8xf32>
    %cst_18 = arith.constant 1.000000e+00 : f32
    %23 = vector.broadcast %cst_18 : f32 to vector<8x8xf32>
    %24 = arith.addf %22, %23 : vector<8x8xf32>
    %cst_19 = arith.constant 5.000000e-01 : f32
    %25 = vector.broadcast %cst_19 : f32 to vector<8x8xf32>
    %26 = arith.mulf %25, %24 : vector<8x8xf32>
    %27 = math.exp %26 : vector<8x8xf32>
    %cst_20 = arith.constant dense<0.000000e+00> : vector<8xf32>
    %28 = vector.multi_reduction <add>, %27, %cst_20 [0] : vector<8x8xf32> to vector<8xf32>
    %29 = vector.shape_cast %28 : vector<8xf32> to vector<1x8xf32>
    %30 = vector.broadcast %29 : vector<1x8xf32> to vector<8x8xf32>
    %31 = arith.divf %27, %30 : vector<8x8xf32>
    %c0_21 = arith.constant 0 : index
    %c0_22 = arith.constant 0 : index
    %32 = vector.load %arg9[%c0_21, %c0_22] : memref<8x8xf32, #tpu.memory_space<vmem>>, vector<8x8xf32>
    tpu.vector_store %arg9[%c0_21, %c0_22], %31 {strides = array<i32>} : memref<8x8xf32, #tpu.memory_space<vmem>>, vector<8x8xf32>,
    %c0_23 = arith.constant 0 : index
    %c0_24 = arith.constant 0 : index
    %33 = vector.load %arg2[%c0_23, %c0_24] : memref<8x8xf32, #tpu.memory_space<vmem>>, vector<8x8xf32>
    %34 = arith.addf %26, %33 : vector<8x8xf32>
    %35 = tpu.iota {dimensions = array<i32: 0>} : vector<8x8xi32>
    %36 = arith.sitofp %35 : vector<8x8xi32> to vector<8x8xf32>
    %cst_25 = arith.constant dense<0xFF800000> : vector<8xf32>
    %37 = vector.multi_reduction <maximumf>, %34, %cst_25 [0] : vector<8x8xf32> to vector<8xf32>
    %38 = vector.shape_cast %37 : vector<8xf32> to vector<1x8xf32>
    %39 = vector.broadcast %38 : vector<1x8xf32> to vector<8x8xf32>
    %40 = arith.cmpf oge, %34, %39 : vector<8x8xf32>
    %cst_26 = arith.constant 8.000000e+00 : f32
    %41 = vector.broadcast %cst_26 : f32 to vector<8x8xf32>
    %42 = arith.select %40, %36, %41 : vector<8x8xi1>, vector<8x8xf32>
    %cst_27 = arith.constant dense<0x7F800000> : vector<8xf32>
    %43 = vector.multi_reduction <minimumf>, %42, %cst_27 [0] : vector<8x8xf32> to vector<8xf32>
    %44 = vector.shape_cast %43 : vector<8xf32> to vector<1x8xf32>
    %45 = arith.fptosi %44 : vector<1x8xf32> to vector<1x8xi32>
    %c0_28 = arith.constant 0 : index
    %c0_29 = arith.constant 0 : index
    %46 = vector.load %arg10[%c0_28, %c0_29] : memref<1x8xi32, #tpu.memory_space<vmem>>, vector<1x8xi32>
    tpu.vector_store %arg10[%c0_28, %c0_29], %45 {strides = array<i32>} : memref<1x8xi32, #tpu.memory_space<vmem>>, vector<1x8xi32>,
    return
  }
  func.func @transform_0(%arg0: i32) -> (i32, i32) {
    %c0_i32 = arith.constant 0 : i32
    %c0_i32_0 = arith.constant 0 : i32
    return %arg0, %c0_i32 : i32, i32
  }
  func.func @transform_1(%arg0: i32) -> (i32, i32) {
    %c0_i32 = arith.constant 0 : i32
    %c0_i32_0 = arith.constant 0 : i32
    return %c0_i32, %arg0 : i32, i32
  }
  func.func @transform_2(%arg0: i32) -> (i32, i32) {
    %c0_i32 = arith.constant 0 : i32
    %c0_i32_0 = arith.constant 0 : i32
    %c0_i32_1 = arith.constant 0 : i32
    return %c0_i32, %c0_i32_0 : i32, i32
  }
  func.func @transform_3(%arg0: i32) -> (i32, i32) {
    %c0_i32 = arith.constant 0 : i32
    %c0_i32_0 = arith.constant 0 : i32
    %c0_i32_1 = arith.constant 0 : i32
    return %c0_i32, %c0_i32_0 : i32, i32
  }
  func.func @transform_4(%arg0: i32) -> (i32, i32) {
    %c0_i32 = arith.constant 0 : i32
    %c0_i32_0 = arith.constant 0 : i32
    %c0_i32_1 = arith.constant 0 : i32
    return %c0_i32, %c0_i32_0 : i32, i32
  }
  func.func @transform_5(%arg0: i32) -> (i32, i32) {
    %c0_i32 = arith.constant 0 : i32
    %c0_i32_0 = arith.constant 0 : i32
    %c0_i32_1 = arith.constant 0 : i32
    return %c0_i32, %c0_i32_0 : i32, i32
  }
  func.func @transform_6(%arg0: i32) -> (i32, i32) {
    %c0_i32 = arith.constant 0 : i32
    %c0_i32_0 = arith.constant 0 : i32
    %c0_i32_1 = arith.constant 0 : i32
    return %c0_i32, %c0_i32_0 : i32, i32
  }
  func.func @transform_7(%arg0: i32) -> (i32, i32) {
    %c0_i32 = arith.constant 0 : i32
    %c0_i32_0 = arith.constant 0 : i32
    %c0_i32_1 = arith.constant 0 : i32
    return %c0_i32, %c0_i32_0 : i32, i32
  }
  func.func @transform_8(%arg0: i32) -> (i32, i32) {
    %c0_i32 = arith.constant 0 : i32
    %c0_i32_0 = arith.constant 0 : i32
    return %c0_i32, %arg0 : i32, i32
  }
  func.func @transform_9(%arg0: i32) -> (i32, i32) {
    %c0_i32 = arith.constant 0 : i32
    %c0_i32_0 = arith.constant 0 : i32
    return %c0_i32, %arg0 : i32, i32
  }
}

</mosaic_0001>

<llo_original>
// kernel: tpu_custom_call.1
$region0: #{tpu_custom_call.1}
  #allocation0 [shape = 'u32[]', space=smem, size = 0x4, offset = 0x4, fixed_abs, tag = 'smem constant byte address 0x4 - core index']
  #allocation1 [shape = 'u32[144,128]{1,0:T(1,128)}', space=vmem, size = 0x12000, scoped, tag = 'internal scratch']
  %s0 = inlined_call_operand.vmem [shape: f32[8,32], index: 0, kind: input, shape index: {}]
  %s1 = inlined_call_operand.vmem [shape: f32[8,8], index: 1, kind: input, shape index: {}]
  %s2 = inlined_call_operand.vmem [shape: f32[32,64], index: 2, kind: input, shape index: {}]
  %s3 = inlined_call_operand.vmem [shape: f32[1,64], index: 3, kind: input, shape index: {}]
  %s4 = inlined_call_operand.vmem [shape: f32[64,16], index: 4, kind: input, shape index: {}]
  %s5 = inlined_call_operand.vmem [shape: f32[1,16], index: 5, kind: input, shape index: {}]
  %s6 = inlined_call_operand.vmem [shape: f32[8,16], index: 6, kind: input, shape index: {}]
  %s7 = inlined_call_operand.vmem [shape: f32[8,1], index: 7, kind: input, shape index: {}]
  %s8 = inlined_call_operand.hbm [shape: f32[8,8], index: 8, kind: output, shape index: {0}]
  %s9 = inlined_call_operand.hbm [shape: s32[1,8], index: 9, kind: output, shape index: {1}]
  %10 = xla_tuple %s8, %s9
  %s11 = sld [smem:[#allocation0]]
  $region50: #{tpu_custom_call.1} parent=0
    _
  %s13 = ssub.s32 1, %s11
  %s14 = scalar_select 0, %s13, %s11
  $region1: #{tpu_custom_call.1} parent=0
    #allocation2 [shape = 'u8[4096]{0}', space=vmem, size = 0x1000, scoped, tag = 'output window, operand 0, single buffered']
    #allocation3 [shape = 's32[1]{0}', space=sflag, size = 0x4, scoped, tag = 'scoped memory for tpu_custom_call.1']
    #allocation4 [shape = 'u8[512]{0}', space=vmem, size = 0x400, scoped, tag = 'output window, operand 1, single buffered']
    #allocation5 [shape = 's32[1]{0}', space=sflag, size = 0x4, scoped, tag = 'scoped memory for tpu_custom_call.1']
    %15 = vsyncpa [#allocation3], 0
    %16 = vsyncpa [#allocation5], 0
    // Predicated region
    $region2: #{tpu_custom_call.1} parent=1 // pred_check
      _
    $region3: #{tpu_custom_call.1} parent=1 // pred_check_branch
      %18 = sbr.rel (0) target = $region5
    $region4: #{tpu_custom_call.1} parent=1 // pred_region
      _
    $region5: #{tpu_custom_call.1} parent=1 // pred_fallthru
      _
    // Predicated region
    $region6: #{tpu_custom_call.1} parent=1 // pred_check
      _
    $region7: #{tpu_custom_call.1} parent=1 // pred_check_branch
      %20 = sbr.rel (0) target = $region9
    $region8: #{tpu_custom_call.1} parent=1 // pred_region
      _
    $region9: #{tpu_custom_call.1} parent=1 // pred_fallthru
      _
    // Predicated region
    $region10: #{tpu_custom_call.1} parent=1 // pred_check
      _
    $region11: #{tpu_custom_call.1} parent=1 // pred_check_branch
      %22 = sbr.rel (0) target = $region13
    $region12: #{tpu_custom_call.1} parent=1 // pred_region
      _
    $region13: #{tpu_custom_call.1} parent=1 // pred_fallthru
      _
    // Predicated region
    $region14: #{tpu_custom_call.1} parent=1 // pred_check
      _
    $region15: #{tpu_custom_call.1} parent=1 // pred_check_branch
      %24 = sbr.rel (0) target = $region17
    $region16: #{tpu_custom_call.1} parent=1 // pred_region
      _
    $region17: #{tpu_custom_call.1} parent=1 // pred_fallthru
      _
    // Predicated region
    $region18: #{tpu_custom_call.1} parent=1 // pred_check
      _
    $region19: #{tpu_custom_call.1} parent=1 // pred_check_branch
      %26 = sbr.rel (0) target = $region21
    $region20: #{tpu_custom_call.1} parent=1 // pred_region
      _
    $region21: #{tpu_custom_call.1} parent=1 // pred_fallthru
      _
    // Predicated region
    $region22: #{tpu_custom_call.1} parent=1 // pred_check
      _
    $region23: #{tpu_custom_call.1} parent=1 // pred_check_branch
      %28 = sbr.rel (0) target = $region25
    $region24: #{tpu_custom_call.1} parent=1 // pred_region
      _
    $region25: #{tpu_custom_call.1} parent=1 // pred_fallthru
      _
    // Predicated region
    $region26: #{tpu_custom_call.1} parent=1 // pred_check
      _
    $region27: #{tpu_custom_call.1} parent=1 // pred_check_branch
      %30 = sbr.rel (0) target = $region29
    $region28: #{tpu_custom_call.1} parent=1 // pred_region
      _
    $region29: #{tpu_custom_call.1} parent=1 // pred_fallthru
      _
    // Predicated region
    $region30: #{tpu_custom_call.1} parent=1 // pred_check
      _
    $region31: #{tpu_custom_call.1} parent=1 // pred_check_branch
      %32 = sbr.rel (0) target = $region33
    $region32: #{tpu_custom_call.1} parent=1 // pred_region
      _
    $region33: #{tpu_custom_call.1} parent=1 // pred_fallthru
      _
    %v33 = vld [vmem:[%s0] sm:$0xff]
    %v34 = vld [vmem:[%s2] sm:$0xff]
    %v35 = vld [vmem:[%s2 + $0x8] sm:$0xff]
    %v36 = vld [vmem:[%s2 + $0x10] sm:$0xff]
    %v37 = vld [vmem:[%s2 + $0x18] sm:$0xff]
    %v38 = vld [vmem:[%s3] sm:$0x1]
    %v40 = vlaneseq
    %v41 = vshrl.u32 %v40, 7
    %v42 = vsub.s32 0, %v41
    %v43 = vrot.slane %v38, %v42
    %vm45 = vcmask 261120
    %v47 = vsel %vm45, %v33, 0
    %49 = vmatprep.subr.mxu0 0.0
    %50 = vmatpush1.msra.mxu0 %v34
    %51 = vmatprep.subr.mxu0 0.0
    %52 = vmatpush1.msra.mxu0 %v35
    %53 = vmatprep.subr.mxu0 0.0
    %54 = vmatpush1.msra.mxu0 %v36
    %55 = vmatprep.subr.mxu0 0.0
    %56 = vmatpush1.msra.mxu0 %v37
    %57 = vmatprep.subr.mxu0 0.0
    %58 = vmatpush1.msra.mxu0 0.0
    %59 = vmatprep.subr.mxu0 0.0
    %60 = vmatpush1.msra.mxu0 0.0
    %61 = vmatprep.subr.mxu0 0.0
    %62 = vmatpush1.msra.mxu0 0.0
    %63 = vmatprep.subr.mxu0 0.0
    %64 = vmatpush1.msra.mxu0 0.0
    %65 = vmatprep.subr.mxu0 0.0
    %66 = vmatpush1.msra.mxu0 0.0
    %67 = vmatprep.subr.mxu0 0.0
    %68 = vmatpush1.msra.mxu0 0.0
    %69 = vmatprep.subr.mxu0 0.0
    %70 = vmatpush1.msra.mxu0 0.0
    %71 = vmatprep.subr.mxu0 0.0
    %72 = vmatpush1.msra.mxu0 0.0
    %73 = vmatprep.subr.mxu0 0.0
    %74 = vmatpush1.msra.mxu0 0.0
    %75 = vmatprep.subr.mxu0 0.0
    %76 = vmatpush1.msra.mxu0 0.0
    %77 = vmatprep.subr.mxu0 0.0
    %78 = vmatpush1.msra.mxu0 0.0
    %79 = vmatprep.subr.mxu0 0.0
    %80 = vmatpush1.msra.mxu0 0.0
    %81 = vmatprep.subr.mxu0 0.0
    %82 = vmatpush1.msra.mxu0 0.0
    %83 = vmatprep.subr.mxu0 0.0
    %84 = vmatpush1.msra.mxu0 0.0
    %85 = vmatprep.subr.mxu0 0.0
    %86 = vmatpush1.msra.mxu0 0.0
    %87 = vmatprep.subr.mxu0 0.0
    %88 = vmatpush1.msra.mxu0 0.0
    %89 = vmatprep.subr.mxu0 0.0
    %90 = vmatpush1.msra.mxu0 0.0
    %91 = vmatprep.subr.mxu0 0.0
    %92 = vmatpush1.msra.mxu0 0.0
    %93 = vmatprep.subr.mxu0 0.0
    %94 = vmatpush1.msra.mxu0 0.0
    %95 = vmatprep.subr.mxu0 0.0
    %96 = vmatpush1.msra.mxu0 0.0
    %97 = vmatprep.subr.mxu0 0.0
    %98 = vmatpush1.msra.mxu0 0.0
    %99 = vmatprep.subr.mxu0 0.0
    %100 = vmatpush1.msra.mxu0 0.0
    %101 = vmatprep.subr.mxu0 0.0
    %102 = vmatpush1.msra.mxu0 0.0
    %103 = vmatprep.subr.mxu0 0.0
    %104 = vmatpush1.msra.mxu0 0.0
    %105 = vmatprep.subr.mxu0 0.0
    %106 = vmatpush1.msra.mxu0 0.0
    %107 = vmatprep.subr.mxu0 0.0
    %108 = vmatpush1.msra.mxu0 0.0
    %109 = vmatprep.subr.mxu0 0.0
    %110 = vmatpush1.msra.mxu0 0.0
    %111 = vmatprep.subr.mxu0 0.0
    %112 = vmatpush1.msra.mxu0 0.0
    %113 = vmatprep.mubr.f32.mxu0 0.0
    %114 = vmatmul.mubr.f32.gmra.mrb[0].mxu0 %v47
    %v115 = vpop.f32.mrb[0].mxu0
    %v116 = vadd.f32 %v43, %v115
    %v117 = vpop.f32.mrb[0].mxu0
    %118 = vdwg.mxu0
    %v119 = vmax.f32 %v116, 0.0
    %v120 = vld [vmem:[%s4] sm:$0xff]
    %v121 = vld [vmem:[%s4 + $0x8] sm:$0xff]
    %v122 = vld [vmem:[%s4 + $0x10] sm:$0xff]
    %v123 = vld [vmem:[%s4 + $0x18] sm:$0xff]
    %v124 = vld [vmem:[%s4 + $0x20] sm:$0xff]
    %v125 = vld [vmem:[%s4 + $0x28] sm:$0xff]
    %v126 = vld [vmem:[%s4 + $0x30] sm:$0xff]
    %v127 = vld [vmem:[%s4 + $0x38] sm:$0xff]
    %v128 = vld [vmem:[%s5] sm:$0x1]
    %v130 = vlaneseq
    %v131 = vshrl.u32 %v130, 7
    %v132 = vsub.s32 0, %v131
    %v133 = vrot.slane %v128, %v132
    %vm135 = vcmask 523264
    %v137 = vsel %vm135, %v119, 0
    %139 = vmatprep.subr.mxu0 0.0
    %140 = vmatpush1.msra.mxu0 %v120
    %141 = vmatprep.subr.mxu0 0.0
    %142 = vmatpush1.msra.mxu0 %v121
    %143 = vmatprep.subr.mxu0 0.0
    %144 = vmatpush1.msra.mxu0 %v122
    %145 = vmatprep.subr.mxu0 0.0
    %146 = vmatpush1.msra.mxu0 %v123
    %147 = vmatprep.subr.mxu0 0.0
    %148 = vmatpush1.msra.mxu0 %v124
    %149 = vmatprep.subr.mxu0 0.0
    %150 = vmatpush1.msra.mxu0 %v125
    %151 = vmatprep.subr.mxu0 0.0
    %152 = vmatpush1.msra.mxu0 %v126
    %153 = vmatprep.subr.mxu0 0.0
    %154 = vmatpush1.msra.mxu0 %v127
    %155 = vmatprep.subr.mxu0 0.0
    %156 = vmatpush1.msra.mxu0 0.0
    %157 = vmatprep.subr.mxu0 0.0
    %158 = vmatpush1.msra.mxu0 0.0
    %159 = vmatprep.subr.mxu0 0.0
    %160 = vmatpush1.msra.mxu0 0.0
    %161 = vmatprep.subr.mxu0 0.0
    %162 = vmatpush1.msra.mxu0 0.0
    %163 = vmatprep.subr.mxu0 0.0
    %164 = vmatpush1.msra.mxu0 0.0
    %165 = vmatprep.subr.mxu0 0.0
    %166 = vmatpush1.msra.mxu0 0.0
    %167 = vmatprep.subr.mxu0 0.0
    %168 = vmatpush1.msra.mxu0 0.0
    %169 = vmatprep.subr.mxu0 0.0
    %170 = vmatpush1.msra.mxu0 0.0
    %171 = vmatprep.subr.mxu0 0.0
    %172 = vmatpush1.msra.mxu0 0.0
    %173 = vmatprep.subr.mxu0 0.0
    %174 = vmatpush1.msra.mxu0 0.0
    %175 = vmatprep.subr.mxu0 0.0
    %176 = vmatpush1.msra.mxu0 0.0
    %177 = vmatprep.subr.mxu0 0.0
    %178 = vmatpush1.msra.mxu0 0.0
    %179 = vmatprep.subr.mxu0 0.0
    %180 = vmatpush1.msra.mxu0 0.0
    %181 = vmatprep.subr.mxu0 0.0
    %182 = vmatpush1.msra.mxu0 0.0
    %183 = vmatprep.subr.mxu0 0.0
    %184 = vmatpush1.msra.mxu0 0.0
    %185 = vmatprep.subr.mxu0 0.0
    %186 = vmatpush1.msra.mxu0 0.0
    %187 = vmatprep.subr.mxu0 0.0
    %188 = vmatpush1.msra.mxu0 0.0
    %189 = vmatprep.subr.mxu0 0.0
    %190 = vmatpush1.msra.mxu0 0.0
    %191 = vmatprep.subr.mxu0 0.0
    %192 = vmatpush1.msra.mxu0 0.0
    %193 = vmatprep.subr.mxu0 0.0
    %194 = vmatpush1.msra.mxu0 0.0
    %195 = vmatprep.subr.mxu0 0.0
    %196 = vmatpush1.msra.mxu0 0.0
    %197 = vmatprep.subr.mxu0 0.0
    %198 = vmatpush1.msra.mxu0 0.0
    %199 = vmatprep.subr.mxu0 0.0
    %200 = vmatpush1.msra.mxu0 0.0
    %201 = vmatprep.subr.mxu0 0.0
    %202 = vmatpush1.msra.mxu0 0.0
    %203 = vmatprep.mubr.f32.mxu0 0.0
    %204 = vmatmul.mubr.f32.gmra.mrb[0].mxu0 %v137
    %v205 = vpop.f32.mrb[0].mxu0
    %v206 = vadd.f32 %v133, %v205
    %v207 = vpop.f32.mrb[0].mxu0
    %208 = vdwg.mxu0
    %v209 = vmax.f32 %v206, 0.0
    %v210 = vld [vmem:[%s6] sm:$0xff]
    %v211 = vld [vmem:[%s7] sm:$0xff]
    %213 = vset.pattern.permute.xlu0 0
    %214 = vperm.xlu0 %213, %v211
    %v215 = vpop.permute.xlu0 %214
    %vm217 = vcmask 130048
    %v219 = vsel %vm217, %v210, 0
    %v222 = vsel %vm217, %v209, 0
    %224 = vmatprep.subr.mxu0 0.0
    %225 = vmatpush1.xpose.msra.mxu0 %v222
    %226 = vmatprep.subr.mxu0 0.0
    %227 = vmatpush1.xpose.msra.mxu0 0.0
    %228 = vmatprep.subr.mxu0 0.0
    %229 = vmatpush1.xpose.msra.mxu0 0.0
    %230 = vmatprep.subr.mxu0 0.0
    %231 = vmatpush1.xpose.msra.mxu0 0.0
    %232 = vmatprep.subr.mxu0 0.0
    %233 = vmatpush1.xpose.msra.mxu0 0.0
    %234 = vmatprep.subr.mxu0 0.0
    %235 = vmatpush1.xpose.msra.mxu0 0.0
    %236 = vmatprep.subr.mxu0 0.0
    %237 = vmatpush1.xpose.msra.mxu0 0.0
    %238 = vmatprep.subr.mxu0 0.0
    %239 = vmatpush1.xpose.msra.mxu0 0.0
    %240 = vmatprep.subr.mxu0 0.0
    %241 = vmatpush1.xpose.msra.mxu0 0.0
    %242 = vmatprep.subr.mxu0 0.0
    %243 = vmatpush1.xpose.msra.mxu0 0.0
    %244 = vmatprep.subr.mxu0 0.0
    %245 = vmatpush1.xpose.msra.mxu0 0.0
    %246 = vmatprep.subr.mxu0 0.0
    %247 = vmatpush1.xpose.msra.mxu0 0.0
    %248 = vmatprep.subr.mxu0 0.0
    %249 = vmatpush1.xpose.msra.mxu0 0.0
    %250 = vmatprep.subr.mxu0 0.0
    %251 = vmatpush1.xpose.msra.mxu0 0.0
    %252 = vmatprep.subr.mxu0 0.0
    %253 = vmatpush1.xpose.msra.mxu0 0.0
    %254 = vmatprep.subr.mxu0 0.0
    %255 = vmatpush1.xpose.msra.mxu0 0.0
    %256 = vmatprep.subr.mxu0 0.0
    %257 = vmatpush1.xpose.msra.mxu0 0.0
    %258 = vmatprep.subr.mxu0 0.0
    %259 = vmatpush1.xpose.msra.mxu0 0.0
    %260 = vmatprep.subr.mxu0 0.0
    %261 = vmatpush1.xpose.msra.mxu0 0.0
    %262 = vmatprep.subr.mxu0 0.0
    %263 = vmatpush1.xpose.msra.mxu0 0.0
    %264 = vmatprep.subr.mxu0 0.0
    %265 = vmatpush1.xpose.msra.mxu0 0.0
    %266 = vmatprep.subr.mxu0 0.0
    %267 = vmatpush1.xpose.msra.mxu0 0.0
    %268 = vmatprep.subr.mxu0 0.0
    %269 = vmatpush1.xpose.msra.mxu0 0.0
    %270 = vmatprep.subr.mxu0 0.0
    %271 = vmatpush1.xpose.msra.mxu0 0.0
    %272 = vmatprep.subr.mxu0 0.0
    %273 = vmatpush1.xpose.msra.mxu0 0.0
    %274 = vmatprep.subr.mxu0 0.0
    %275 = vmatpush1.xpose.msra.mxu0 0.0
    %276 = vmatprep.subr.mxu0 0.0
    %277 = vmatpush1.xpose.msra.mxu0 0.0
    %278 = vmatprep.subr.mxu0 0.0
    %279 = vmatpush1.xpose.msra.mxu0 0.0
    %280 = vmatprep.subr.mxu0 0.0
    %281 = vmatpush1.xpose.msra.mxu0 0.0
    %282 = vmatprep.subr.mxu0 0.0
    %283 = vmatpush1.xpose.msra.mxu0 0.0
    %284 = vmatprep.subr.mxu0 0.0
    %285 = vmatpush1.xpose.msra.mxu0 0.0
    %286 = vmatprep.subr.mxu0 0.0
    %287 = vmatpush1.xpose.msra.mxu0 0.0
    %288 = vmatprep.mubr.f32.mxu0 0.0
    %289 = vmatmul.mubr.f32.gmra.mrb[0].mxu0 %v219
    %v290 = vpop.f32.mrb[0].mxu0
    %v291 = vadd.f32 %v215, %v290
    %v292 = vpop.f32.mrb[0].mxu0
    %293 = vdwg.mxu0
    %v294 = vmul.f32 %v291, 0.5
    %v295 = vtanh.pop %v294
    %v296 = vadd.f32 %v295, 1.0
    %v297 = vmul.f32 %v296, 0.5
    %v298 = vmul.f32 %v297, 1.442695
    %v299 = vpow.pop %v298
    %vm300 = vcmask 64512
    %v301 = vsel %vm300, %v299, 0.0
    %v302 = vrot.slane %v301, 4
    %v303 = vadd.f32 %v301, %v302
    %v304 = vrot.slane %v303, 2
    %v305 = vadd.f32 %v303, %v304
    %v306 = vrot.slane %v305, 1
    %v307 = vadd.f32 %v305, %v306
    %v308 = vrcp.pop %v307
    %v309 = vmul.f32 %v299, %v308
    %310 = vst.msk [vmem:[#allocation2] sm:$0xff] %vm300, %v309
    %v311 = vld [vmem:[%s1] sm:$0xff]
    %v312 = vadd.f32 %v297, %v311
    %v313 = vlaneseq
    %v314 = vshrl.u32 %v313, 7
    %v315 = vcvt.s32.f32 %v314
    %v316 = vsel %vm300, %v312, -inf
    %v317 = vrot.slane %v316, 4
    %v318 = vmax.f32 %v316, %v317
    %v319 = vrot.slane %v318, 2
    %v320 = vmax.f32 %v318, %v319
    %v321 = vrot.slane %v320, 1
    %v322 = vmax.f32 %v320, %v321
    %vm323 = vcmp.ge.f32.partialorder %v312, %v322
    %v324 = vsel %vm323, %v315, 8.0
    %v325 = vsel %vm300, %v324, inf
    %v326 = vrot.slane %v325, 4
    %v327 = vmin.f32 %v325, %v326
    %v328 = vrot.slane %v327, 2
    %v329 = vmin.f32 %v327, %v328
    %v330 = vrot.slane %v329, 1
    %v331 = vmin.f32 %v329, %v330
    %v332 = vcvt.f32.s32.to.zero.pseudo %v331
    %vm333 = vcmask 57344
    %334 = vst.msk [vmem:[#allocation4] sm:$0x1] %vm333, %v332
    // Predicated region
    $region34: #{tpu_custom_call.1} parent=1 // pred_check
      _
    $region35: #{tpu_custom_call.1} parent=1 // pred_check_branch
      %336 = sbr.rel (0) target = $region37
    $region36: #{tpu_custom_call.1} parent=1 // pred_region
      %s338 = ssub.s32 128, 128
      %339 = vsyncadd [#allocation3], %s338
      %s341 = sshll.u32 [#allocation2], 4
      %s342 = int_to_ptr.vmem [resolvable:$true] %s341
      %344 = dma.vmem_to_hbm [thread:$0]  %s342, 128, %s8, [#allocation3]
    $region37: #{tpu_custom_call.1} parent=1 // pred_fallthru
      _
    // Predicated region
    $region38: #{tpu_custom_call.1} parent=1 // pred_check
      _
    $region39: #{tpu_custom_call.1} parent=1 // pred_check_branch
      %346 = sbr.rel (0) target = $region41
    $region40: #{tpu_custom_call.1} parent=1 // pred_region
      %s348 = ssub.s32 16, 16
      %349 = vsyncadd [#allocation5], %s348
      %s351 = sshll.u32 [#allocation4], 4
      %s352 = int_to_ptr.vmem [resolvable:$true] %s351
      %354 = dma.vmem_to_hbm [thread:$0]  %s352, 16, %s9, [#allocation5]
    $region41: #{tpu_custom_call.1} parent=1 // pred_fallthru
      _
    // Predicated region
    $region42: #{tpu_custom_call.1} parent=1 // pred_check
      _
    $region43: #{tpu_custom_call.1} parent=1 // pred_check_branch
      %356 = sbr.rel (0) target = $region45
    $region44: #{tpu_custom_call.1} parent=1 // pred_region
      %357 = dma.done [#allocation3], 128
    $region45: #{tpu_custom_call.1} parent=1 // pred_fallthru
      _
    // Predicated region
    $region46: #{tpu_custom_call.1} parent=1 // pred_check
      _
    $region47: #{tpu_custom_call.1} parent=1 // pred_check_branch
      %359 = sbr.rel (0) target = $region49
    $region48: #{tpu_custom_call.1} parent=1 // pred_region
      %360 = dma.done [#allocation5], 16
    $region49: #{tpu_custom_call.1} parent=1 // pred_fallthru
      _
    %361 = vsyncpa [#allocation3], 1
    %362 = vsyncpa [#allocation5], 1

</llo_original>
